<compile_context>
chip_gen: v6e
topology: v6e:2x2x1
jax: 0.10.0
libtpu: 0.0.40
codegen_flags: <defaults>
</compile_context>

<pallas_src>
import jax
import jax.numpy as jnp
from jax.experimental import pallas as pl
from jax.experimental.pallas import tpu as pltpu


def _normalize_kernel(x_ref, scale_ref, bias_ref, o_ref):
    # x_ref: (TM, TC); scale_ref/bias_ref: (TM, 1) float32, broadcast over lanes.
    x = x_ref[...].astype(jnp.float32)
    o_ref[...] = (x * scale_ref[...] + bias_ref[...]).astype(o_ref.dtype)


def _physical_vmem_bytes():
    try:
        info = pltpu.get_tpu_info()
        v = getattr(info, "vmem_capacity_bytes", None)
        if v:
            return int(v)
    except Exception:
        pass
    return 64 * 1024 * 1024  # conservative default (v7x per-TC VMEM)


def _per_channel(v, c, name):
    v = jnp.asarray(v, dtype=jnp.float32).reshape(-1)
    if v.size == 1:
        v = jnp.broadcast_to(v, (c,))
    elif v.size != c:
        raise ValueError(f"{name}: expected a scalar or {c} elements, got {v.size}")
    return v


def _pick_row_tile(rows, cap, quantum):
    """Largest row tile <= cap that is a multiple of `quantum` (or == rows),
    preferring exact divisors of rows (no ragged last tile), and forcing at
    least 2 grid steps when rows >= 2*quantum (multi-TC sharding + overlap)."""
    if rows <= quantum:
        return rows
    if cap >= rows:
        if rows >= 2 * quantum:
            cap = max(quantum, ((rows // 2) // quantum) * quantum)
        else:
            return rows
    cap = max(quantum, min(cap, rows))
    cap = (cap // quantum) * quantum
    for t in range(cap, quantum - 1, -quantum):
        if rows % t == 0:
            return t
    return cap


def _pick_col_tile(cols, per_row_fixed, per_elem_bytes, pipe_budget, tm_min):
    # Keep lane-dense full rows whenever even the minimal row tile fits.
    if tm_min * (cols * per_elem_bytes + per_row_fixed) <= pipe_budget:
        return cols
    tc = (pipe_budget // tm_min - per_row_fixed) // per_elem_bytes
    tc = max(128, (tc // 128) * 128)
    if cols >= 128:
        tc = min(tc, (cols // 128) * 128)
    return tc


def normalize_input(x, mean, std, *, out_dtype=None):
    """x: (N, C, H, W); mean/std: scalar or per-channel (any broadcastable
    shape whose flattened size is 1 or C)."""
    N, C, H, W = x.shape
    rows, cols = N * C, H * W
    out_dtype = x.dtype if out_dtype is None else jnp.dtype(out_dtype)

    x2 = x.reshape(rows, cols)  # free reshape for contiguous NCHW

    # (x - m) / s == x * (1/s) + (-m/s); constants stay in float32.
    mean_c = _per_channel(mean, C, "mean")
    std_c = _per_channel(std, C, "std")
    scale = 1.0 / std_c
    bias = -mean_c * scale
    # Row r of x2 corresponds to channel r % C.
    scale_rows = jnp.tile(scale, N).reshape(rows, 1)
    bias_rows = jnp.tile(bias, N).reshape(rows, 1)

    # Per-generation VMEM budgets (v5e/v6e: 128 MiB physical, v7x: 64 MiB).
    physical_vmem = _physical_vmem_bytes()
    pipe_budget = (physical_vmem * 3) // 8    # double-buffered in + out + consts
    vmem_limit = (physical_vmem * 3) // 4     # headroom for Mosaic internal scratch

    in_b = x.dtype.itemsize
    out_b = out_dtype.itemsize
    per_elem = 2 * (in_b + out_b)             # double-buffered input + output
    per_row_fixed = 2 * 2 * 128 * 4           # (tm,1) f32 scale+bias, lane-padded, 2 buffers

    quantum = 16 if min(in_b, out_b) < 4 else 8
    tm_min = min(rows, quantum)

    tc = _pick_col_tile(cols, per_row_fixed, per_elem, pipe_budget, tm_min)
    tm_cap = pipe_budget // (tc * per_elem + per_row_fixed)
    tm = _pick_row_tile(rows, tm_cap, quantum)

    grid = (pl.cdiv(rows, tm), pl.cdiv(cols, tc))

    x_spec = pl.BlockSpec((tm, tc), lambda i, j: (i, j))
    sb_spec = pl.BlockSpec((tm, 1), lambda i, j: (i, 0))
    o_spec = pl.BlockSpec((tm, tc), lambda i, j: (i, j))

    out2 = pl.pallas_call(
        _normalize_kernel,
        out_shape=jax.ShapeDtypeStruct((rows, cols), out_dtype),
        grid_spec=pltpu.PrefetchScalarGridSpec(
            num_scalar_prefetch=0,
            grid=grid,
            in_specs=[x_spec, sb_spec, sb_spec],
            out_specs=o_spec,
        ),
        compiler_params=pltpu.CompilerParams(
            dimension_semantics=("parallel", "parallel"),
            vmem_limit_bytes=vmem_limit,
        ),
    )(x2, scale_rows, bias_rows)

    return out2.reshape(N, C, H, W)


if __name__ == "__main__":
    key = jax.random.PRNGKey(0)

    # Primary small test: matches the module's implied shapes.
    N, C, H, W = 2, 4, 16, 16
    x = jax.random.normal(key, (N, C, H, W), dtype=jnp.float32)
    mean = jnp.array([0.485, 0.456, 0.406, 0.500], dtype=jnp.float32)
    std = jnp.array([0.229, 0.224, 0.225, 0.250], dtype=jnp.float32)

    out = jax.block_until_ready(normalize_input(x, mean, std))
    ref = (x - mean[None, :, None, None]) / std[None, :, None, None]
    assert out.shape == ref.shape and out.dtype == ref.dtype
    assert jnp.allclose(out, ref, rtol=1e-5, atol=1e-6)

    # Secondary check: rows >= 16 exercises the multi-step (row-split) grid.
    key2 = jax.random.fold_in(key, 1)
    x2 = jax.random.normal(key2, (4, 8, 16, 16), dtype=jnp.float32)
    mean2 = jnp.arange(8, dtype=jnp.float32) * 0.1 - 0.3
    std2 = jnp.arange(8, dtype=jnp.float32) * 0.05 + 0.2
    out2 = jax.block_until_ready(normalize_input(x2, mean2, std2))
    ref2 = (x2 - mean2[None, :, None, None]) / std2[None, :, None, None]
    assert jnp.allclose(out2, ref2, rtol=1e-5, atol=1e-6)

    print("KERNEL_OK")
</pallas_src>

<mosaic_0001>
module attributes {stable_mosaic.version = 11 : i64} {
  func.func @_normalize_kernel(%arg0: i32, %arg1: i32, %arg2: memref<8x256xf32, #tpu.memory_space<vmem>>, %arg3: memref<8x1xf32, #tpu.memory_space<vmem>>, %arg4: memref<8x1xf32, #tpu.memory_space<vmem>>, %arg5: memref<8x256xf32, #tpu.memory_space<vmem>>) attributes {dimension_semantics = [#tpu.dimension_semantics<parallel>, #tpu.dimension_semantics<parallel>], iteration_bounds = array<i64: 1, 1>, scalar_prefetch = 0 : i64, scratch_operands = 0 : i64, tpu.core_type = #tpu.core_type<tc>, window_params = [{transform_indices = @transform_0, window_bounds = array<i64: 8, 256>}, {transform_indices = @transform_1, window_bounds = array<i64: 8, 1>}, {transform_indices = @transform_2, window_bounds = array<i64: 8, 1>}, {transform_indices = @transform_3, window_bounds = array<i64: 8, 256>}]} {
    %c0 = arith.constant 0 : index
    %c0_0 = arith.constant 0 : index
    %0 = vector.load %arg2[%c0, %c0_0] : memref<8x256xf32, #tpu.memory_space<vmem>>, vector<8x256xf32>
    %c0_1 = arith.constant 0 : index
    %c0_2 = arith.constant 0 : index
    %1 = vector.load %arg3[%c0_1, %c0_2] : memref<8x1xf32, #tpu.memory_space<vmem>>, vector<8x1xf32>
    %2 = vector.broadcast %1 : vector<8x1xf32> to vector<8x256xf32>
    %3 = arith.mulf %0, %2 : vector<8x256xf32>
    %c0_3 = arith.constant 0 : index
    %c0_4 = arith.constant 0 : index
    %4 = vector.load %arg4[%c0_3, %c0_4] : memref<8x1xf32, #tpu.memory_space<vmem>>, vector<8x1xf32>
    %5 = vector.broadcast %4 : vector<8x1xf32> to vector<8x256xf32>
    %6 = arith.addf %3, %5 : vector<8x256xf32>
    %c0_5 = arith.constant 0 : index
    %c0_6 = arith.constant 0 : index
    %7 = vector.load %arg5[%c0_5, %c0_6] : memref<8x256xf32, #tpu.memory_space<vmem>>, vector<8x256xf32>
    tpu.vector_store %arg5[%c0_5, %c0_6], %6 {strides = array<i32>} : memref<8x256xf32, #tpu.memory_space<vmem>>, vector<8x256xf32>,
    return
  }
  func.func @transform_0(%arg0: i32, %arg1: i32) -> (i32, i32) {
    %c0_i32 = arith.constant 0 : i32
    return %arg0, %arg1 : i32, i32
  }
  func.func @transform_1(%arg0: i32, %arg1: i32) -> (i32, i32) {
    %c0_i32 = arith.constant 0 : i32
    %c0_i32_0 = arith.constant 0 : i32
    return %arg0, %c0_i32 : i32, i32
  }
  func.func @transform_2(%arg0: i32, %arg1: i32) -> (i32, i32) {
    %c0_i32 = arith.constant 0 : i32
    %c0_i32_0 = arith.constant 0 : i32
    return %arg0, %c0_i32 : i32, i32
  }
  func.func @transform_3(%arg0: i32, %arg1: i32) -> (i32, i32) {
    %c0_i32 = arith.constant 0 : i32
    return %arg0, %arg1 : i32, i32
  }
}

</mosaic_0001>

<llo_original>
// kernel: tpu_custom_call.1
$region0: #{tpu_custom_call.1}
  #allocation0 [shape = 'u32[]', space=smem, size = 0x4, offset = 0x4, fixed_abs, tag = 'smem constant byte address 0x4 - core index']
  #allocation1 [shape = 'u32[144,128]{1,0:T(1,128)}', space=vmem, size = 0x12000, scoped, tag = 'internal scratch']
  %s0 = inlined_call_operand.vmem [shape: f32[8,256], index: 0, kind: input, shape index: {}]
  %s1 = inlined_call_operand.vmem [shape: f32[8,1], index: 1, kind: input, shape index: {}]
  %s2 = inlined_call_operand.vmem [shape: f32[8,1], index: 2, kind: input, shape index: {}]
  %s3 = inlined_call_operand.hbm [shape: f32[8,256], index: 3, kind: output, shape index: {}]
  %s4 = sld [smem:[#allocation0]]
  $region22: #{tpu_custom_call.1} parent=0
    _
  %s6 = ssub.s32 1, %s4
  %s7 = scalar_select 0, %s6, %s4
  $region1: #{tpu_custom_call.1} parent=0
    #allocation2 [shape = 'u8[8192]{0}', space=vmem, size = 0x2000, scoped, tag = 'output window, operand 0, single buffered']
    #allocation3 [shape = 's32[1]{0}', space=sflag, size = 0x4, scoped, tag = 'scoped memory for tpu_custom_call.1']
    %8 = vsyncpa [#allocation3], 0
    // Predicated region
    $region2: #{tpu_custom_call.1} parent=1 // pred_check
      _
    $region3: #{tpu_custom_call.1} parent=1 // pred_check_branch
      %10 = sbr.rel (0) target = $region5
    $region4: #{tpu_custom_call.1} parent=1 // pred_region
      _
    $region5: #{tpu_custom_call.1} parent=1 // pred_fallthru
      _
    // Predicated region
    $region6: #{tpu_custom_call.1} parent=1 // pred_check
      _
    $region7: #{tpu_custom_call.1} parent=1 // pred_check_branch
      %12 = sbr.rel (0) target = $region9
    $region8: #{tpu_custom_call.1} parent=1 // pred_region
      _
    $region9: #{tpu_custom_call.1} parent=1 // pred_fallthru
      _
    // Predicated region
    $region10: #{tpu_custom_call.1} parent=1 // pred_check
      _
    $region11: #{tpu_custom_call.1} parent=1 // pred_check_branch
      %14 = sbr.rel (0) target = $region13
    $region12: #{tpu_custom_call.1} parent=1 // pred_region
      _
    $region13: #{tpu_custom_call.1} parent=1 // pred_fallthru
      _
    %v15 = vld [vmem:[%s0] sm:$0xff]
    %v16 = vld [vmem:[%s0 + $0x8] sm:$0xff]
    %v17 = vld [vmem:[%s1] sm:$0xff]
    %19 = vset.pattern.permute.xlu0 0
    %20 = vperm.xlu0 %19, %v17
    %v21 = vpop.permute.xlu0 %20
    %v23 = vmul.f32 %v15, %v21
    %v24 = vmul.f32 %v16, %v21
    %v25 = vld [vmem:[%s2] sm:$0xff]
    %27 = vset.pattern.permute.xlu0 0
    %28 = vperm.xlu0 %27, %v25
    %v29 = vpop.permute.xlu0 %28
    %v31 = vadd.f32 %v23, %v29
    %v32 = vadd.f32 %v24, %v29
    %33 = vst [vmem:[#allocation2] sm:$0xff] %v31
    %34 = vst [vmem:[#allocation2 + $0x8] sm:$0xff] %v32
    // Predicated region
    $region14: #{tpu_custom_call.1} parent=1 // pred_check
      _
    $region15: #{tpu_custom_call.1} parent=1 // pred_check_branch
      %36 = sbr.rel (0) target = $region17
    $region16: #{tpu_custom_call.1} parent=1 // pred_region
      %s38 = ssub.s32 256, 256
      %39 = vsyncadd [#allocation3], %s38
      %s41 = sshll.u32 [#allocation2], 4
      %s42 = int_to_ptr.vmem [resolvable:$true] %s41
      %44 = dma.vmem_to_hbm [thread:$0]  %s42, 256, %s3, [#allocation3]
    $region17: #{tpu_custom_call.1} parent=1 // pred_fallthru
      _
    // Predicated region
    $region18: #{tpu_custom_call.1} parent=1 // pred_check
      _
    $region19: #{tpu_custom_call.1} parent=1 // pred_check_branch
      %46 = sbr.rel (0) target = $region21
    $region20: #{tpu_custom_call.1} parent=1 // pred_region
      %47 = dma.done [#allocation3], 256
    $region21: #{tpu_custom_call.1} parent=1 // pred_fallthru
      _
    %48 = vsyncpa [#allocation3], 1

</llo_original>
